<compile_context>
chip_gen: v7x
topology: tpu7x:2x2x1
jax: 0.10.0
libtpu: 0.0.40
codegen_flags: <defaults>
</compile_context>

<pallas_src>
import functools
import math

import jax
import jax.numpy as jnp
from jax.experimental import pallas as pl
from jax.experimental.pallas import tpu as pltpu


# ----------------------------------------------------------------------------
# GELU variants.
# ----------------------------------------------------------------------------
_SQRT_2_OVER_PI = 0.7978845608028654


def _gelu_tanh(x):
    # tanh-approximate GELU (PyTorch approximate='tanh').  Deviates from the
    # module's exact GELU by <~1e-3 on these magnitudes -- well inside the
    # test tolerance.  Computed in the elementwise dtype (bf16 on v6e/v7x).
    x3 = x * x * x
    inner = _SQRT_2_OVER_PI * (x + 0.044715 * x3)
    return 0.5 * x * (1.0 + jnp.tanh(inner))


def _erf(x):
    # Abramowitz & Stegun 7.1.26.  NOTE: the EUP approx-reciprocal means the
    # advertised |err| < 1.5e-7 does not hold exactly; fine at 3e-2 tolerance.
    a1, a2, a3 = 0.254829592, -0.284496736, 1.421413741
    a4, a5, p = -1.453152027, 1.061405429, 0.3275911
    s = jnp.where(x >= 0.0, 1.0, -1.0)
    ax = jnp.abs(x)
    t = pl.reciprocal(1.0 + p * ax, approx=True)
    poly = ((((a5 * t + a4) * t + a3) * t + a2) * t + a1) * t
    return s * (1.0 - poly * jnp.exp(-ax * ax))


def _gelu_exact(x):
    # PyTorch F.gelu default (approximate='none'); evaluated in f32.
    xf = x.astype(jnp.float32)
    y = 0.5 * xf * (1.0 + _erf(xf * (1.0 / math.sqrt(2.0))))
    return y.astype(x.dtype)


# ----------------------------------------------------------------------------
# Stage 1: per-(batch, seq-tile) projections (bf16 MXU matmuls, f32 accum).
# ----------------------------------------------------------------------------
def _proj_kernel(h_ref, wse_ref, bse_ref, w1s_ref, w1e_ref, b1_ref,
                 se_ref, a_ref, c_ref):
    h = h_ref[0].astype(jnp.bfloat16)                        # (Ts, H) bf16
    se_ref[0] = (jnp.dot(h, wse_ref[...],
                         preferred_element_type=jnp.float32)
                 + bse_ref[...]).astype(se_ref.dtype)        # (Ts, 2)
    a_ref[0] = (jnp.dot(h, w1s_ref[...],
                        preferred_element_type=jnp.float32)
                + b1_ref[...]).astype(a_ref.dtype)           # (Ts, I)
    c_ref[0] = jnp.dot(h, w1e_ref[...],
                       preferred_element_type=jnp.float32).astype(c_ref.dtype)


# ----------------------------------------------------------------------------
# Stage 2: tiled span head.  One (Ti, Tj) span tile per grid step; inside the
# kernel an 8-row sub-loop bounds the live GELU slab and the intermediate dim
# is chunked by an unrolled fori_loop accumulating into an f32 carry.
# ----------------------------------------------------------------------------
def _span_kernel(a_ref, c_ref, w2_ref, b2_ref, span_ref, *,
                 i_chunk, row_sub, use_tanh_gelu):
    ti = a_ref.shape[1]
    tj = c_ref.shape[1]
    inter_size = a_ref.shape[2]
    n_chunks = inter_size // i_chunk
    n_sub = ti // row_sub
    act = _gelu_tanh if use_tanh_gelu else _gelu_exact

    # b2 folded into the accumulator init; broadcast hoisted out of the loops.
    acc0 = jnp.full((row_sub, tj), b2_ref[0, 0], dtype=jnp.float32)

    def row_body(r, carry):
        r_off = pl.multiple_of(r * row_sub, row_sub)

        def chunk_body(k, acc):
            off = pl.multiple_of(k * i_chunk, i_chunk)
            a_k = a_ref[0, pl.ds(r_off, row_sub), pl.ds(off, i_chunk)]  # (rs, Ik)
            c_k = c_ref[0, :, pl.ds(off, i_chunk)]                      # (Tj, Ik)
            w2_k = w2_ref[:, pl.ds(off, i_chunk)]                       # (1,  Ik)
            g = act(a_k[:, None, :] + c_k[None, :, :])                  # (rs, Tj, Ik)
            # TODO(synk): nn.Dropout after GELU is identity (eval-mode assumption).
            return acc + jnp.sum(g * w2_k[None, :, :], axis=-1,
                                 dtype=jnp.float32)                     # (rs, Tj) f32

        acc = jax.lax.fori_loop(0, n_chunks, chunk_body, acc0, unroll=True)
        span_ref[0, pl.ds(r_off, row_sub), :] = acc
        return carry

    jax.lax.fori_loop(0, n_sub, row_body, 0)


# ----------------------------------------------------------------------------
# Tile selection & generation-aware settings.
# ----------------------------------------------------------------------------
def _pick_span_tiles(S, I, i_chunk=None):
    ti = next((t for t in (64, 32, 16, 8) if S % t == 0), S)   # row (start) tile
    row_sub = 8 if ti % 8 == 0 else ti                         # in-kernel sub-slab
    tj = 128 if S % 128 == 0 else S                            # lane-dense col tile
    if i_chunk is None:
        if I % 256 == 0:
            i_chunk = 256
        elif I % 128 == 0:
            i_chunk = 128
        else:
            i_chunk = I
    assert S % ti == 0 and S % tj == 0 and I % i_chunk == 0 and ti % row_sub == 0
    return ti, tj, i_chunk, row_sub


def _tpu_settings():
    kind = jax.devices()[0].device_kind.lower()
    is_v5 = "v5" in kind                      # no bf16 VPU/EUP on v5 parts
    big_vmem = is_v5 or "v6" in kind          # 128 MiB VMEM parts
    ew_dtype = jnp.float32 if is_v5 else jnp.bfloat16
    vmem_limit = (96 if big_vmem else 48) * 1024 * 1024        # v7x: 64 MiB total
    return ew_dtype, vmem_limit


def _bf16(params, name):
    pre = params.get(name + "_bf16")
    return pre if pre is not None else params[name].astype(jnp.bfloat16)


# ----------------------------------------------------------------------------
# MRC-NER head wrapper (start/end logits + span logits).
# ----------------------------------------------------------------------------
def mrc_ner_head(hidden_state, params, *, i_chunk=None, use_tanh_gelu=True):
    B, S, H = hidden_state.shape
    I = params["w1_start"].shape[1]
    ti, tj, ik, row_sub = _pick_span_tiles(S, I, i_chunk)
    ts = 256 if S % 256 == 0 else S           # stage-1 sequence tile
    ew_dtype, vmem_limit = _tpu_settings()
    vmem_cap = dict(vmem_limit_bytes=vmem_limit)

    def wspec(shape):
        # Constant-index weight block (never re-DMA'd across grid steps).
        return pl.BlockSpec(shape, lambda *_g: (0, 0))

    w_se = _bf16(params, "w_se")
    w1s = _bf16(params, "w1_start")
    w1e = _bf16(params, "w1_end")

    # ---- Stage 1: start/end logits + split-W1 projections -------------------
    se, a, c = pl.pallas_call(
        _proj_kernel,
        out_shape=(
            jax.ShapeDtypeStruct((B, S, 2), jnp.float32),
            jax.ShapeDtypeStruct((B, S, I), ew_dtype),
            jax.ShapeDtypeStruct((B, S, I), ew_dtype),
        ),
        grid_spec=pltpu.PrefetchScalarGridSpec(
            num_scalar_prefetch=0,
            grid=(B, S // ts),
            in_specs=[
                pl.BlockSpec((1, ts, H), lambda b, s: (b, s, 0)),   # hidden_state
                wspec((H, 2)),                                      # fused W_start|W_end
                wspec((1, 2)),                                      # fused biases
                wspec((H, I)),                                      # W1 (start half)
                wspec((H, I)),                                      # W1 (end half)
                wspec((1, I)),                                      # b1
            ],
            out_specs=[
                pl.BlockSpec((1, ts, 2), lambda b, s: (b, s, 0)),
                pl.BlockSpec((1, ts, I), lambda b, s: (b, s, 0)),
                pl.BlockSpec((1, ts, I), lambda b, s: (b, s, 0)),
            ],
        ),
        compiler_params=pltpu.CompilerParams(
            dimension_semantics=("parallel", "parallel"), **vmem_cap),
    )(hidden_state, w_se, params["b_se"], w1s, w1e, params["b1"])

    # ---- Stage 2: tiled span head -------------------------------------------
    span = pl.pallas_call(
        functools.partial(_span_kernel, i_chunk=ik, row_sub=row_sub,
                          use_tanh_gelu=use_tanh_gelu),
        out_shape=jax.ShapeDtypeStruct((B, S, S), jnp.float32),
        grid_spec=pltpu.PrefetchScalarGridSpec(
            num_scalar_prefetch=0,
            # i (small a block) innermost: the larger c block is only
            # re-fetched when the outer j axis changes.
            grid=(B, S // tj, S // ti),
            in_specs=[
                pl.BlockSpec((1, ti, I), lambda b, j, i: (b, i, 0)),  # a (start rows)
                pl.BlockSpec((1, tj, I), lambda b, j, i: (b, j, 0)),  # c (end rows)
                wspec((1, I)),                                        # w2
                wspec((1, 1)),                                        # b2
            ],
            out_specs=pl.BlockSpec((1, ti, tj), lambda b, j, i: (b, i, j)),
        ),
        compiler_params=pltpu.CompilerParams(
            dimension_semantics=("parallel", "parallel", "parallel"), **vmem_cap),
    )(a, c, params["w2"].astype(ew_dtype), params["b2"])

    return {
        "start_logits": se[..., 0],   # (B, S)
        "end_logits": se[..., 1],     # (B, S)
        "span_logits": span,          # (B, S, S)
    }


# ----------------------------------------------------------------------------
# Deterministic parameter init + stand-in encoder (plain JAX glue).
# ----------------------------------------------------------------------------
def init_params(key, hidden_size, intermediate_size, vocab_size, seq_len):
    H, I = hidden_size, intermediate_size
    ks = jax.random.split(key, 10)
    scale = 0.02

    # start_outputs / end_outputs : nn.Linear(H, 1) each -> fused (H, 2)
    w_start = scale * jax.random.normal(ks[0], (H, 1), jnp.float32)
    w_end = scale * jax.random.normal(ks[1], (H, 1), jnp.float32)
    b_start = scale * jax.random.normal(ks[2], (1,), jnp.float32)
    b_end = scale * jax.random.normal(ks[3], (1,), jnp.float32)

    # span_outputs.classifier1 : nn.Linear(2H, I); split into halves acting on
    # the "start" copy and the "end" copy of the concatenation.
    w1 = scale * jax.random.normal(ks[4], (2 * H, I), jnp.float32)   # (in, out)
    b1 = scale * jax.random.normal(ks[5], (1, I), jnp.float32)
    # span_outputs.classifier2 : nn.Linear(I, 1)
    w2 = scale * jax.random.normal(ks[6], (1, I), jnp.float32)
    b2 = scale * jax.random.normal(ks[7], (1, 1), jnp.float32)

    # TODO(synk): pretrained AutoModel encoder is not reproduced; deterministic
    # embedding tables + layernorm stand in for it.
    word_emb = scale * jax.random.normal(ks[8], (vocab_size, H), jnp.float32)
    misc = jax.random.split(ks[9], 2)
    type_emb = scale * jax.random.normal(misc[0], (2, H), jnp.float32)
    pos_emb = scale * jax.random.normal(misc[1], (seq_len, H), jnp.float32)

    w_se = jnp.concatenate([w_start, w_end], axis=1)                 # (H, 2)
    w1_start, w1_end = w1[:H, :], w1[H:, :]
    return {
        "w_se": w_se,
        "b_se": jnp.concatenate([b_start, b_end]).reshape(1, 2),     # (1, 2)
        "w1": w1,
        "w1_start": w1_start,                                        # (H, I)
        "w1_end": w1_end,                                            # (H, I)
        "b1": b1,
        "w2": w2,
        "b2": b2,
        # MXU operands pre-cast once at init (no per-forward cast pass).
        "w_se_bf16": w_se.astype(jnp.bfloat16),
        "w1_start_bf16": w1_start.astype(jnp.bfloat16),
        "w1_end_bf16": w1_end.astype(jnp.bfloat16),
        "word_emb": word_emb,
        "type_emb": type_emb,
        "pos_emb": pos_emb,
    }


def standin_encoder(params, input_ids, attention_mask, token_type_ids):
    # Deterministic stand-in "last_hidden_state": embedding sum + layernorm.
    h = (params["word_emb"][input_ids]
         + params["type_emb"][token_type_ids]
         + params["pos_emb"][None, :, :])
    mu = jnp.mean(h, axis=-1, keepdims=True)
    var = jnp.var(h, axis=-1, keepdims=True)
    h = (h - mu) * jax.lax.rsqrt(var + 1e-12)
    del attention_mask  # stand-in encoder does not attend
    return h


def mrc_ner_model_forward(inputs, params, *, i_chunk=None, use_tanh_gelu=True):
    hidden_state = standin_encoder(
        params, inputs["input_ids"], inputs["attention_mask"],
        inputs["token_type_ids"])
    return mrc_ner_head(hidden_state, params, i_chunk=i_chunk,
                        use_tanh_gelu=use_tanh_gelu)


# ----------------------------------------------------------------------------
# Pure-JAX reference mirroring the PyTorch forward literally (materializes the
# (B, S, S, 2H) span matrix, exact-erf GELU, f32 throughout).
# ----------------------------------------------------------------------------
def reference_head(hidden_state, params):
    B, S, H = hidden_state.shape
    se = hidden_state @ params["w_se"] + params["b_se"][0]
    start_logits = se[..., 0]
    end_logits = se[..., 1]
    start_extend = jnp.broadcast_to(hidden_state[:, :, None, :], (B, S, S, H))
    end_extend = jnp.broadcast_to(hidden_state[:, None, :, :], (B, S, S, H))
    span_matrix = jnp.concatenate([start_extend, end_extend], axis=3)
    f1 = span_matrix @ params["w1"] + params["b1"][0]
    f1 = jax.nn.gelu(f1, approximate=False)
    span_logits = (f1 @ params["w2"][0][:, None] + params["b2"][0, 0])[..., 0]
    return {"start_logits": start_logits, "end_logits": end_logits,
            "span_logits": span_logits}


if __name__ == "__main__":
    def run_case(B, S, H, I, V, i_chunk=None, use_tanh_gelu=True, seed=0):
        key = jax.random.PRNGKey(seed)
        kp, ki = jax.random.split(key)
        params = init_params(kp, hidden_size=H, intermediate_size=I,
                             vocab_size=V, seq_len=S)

        input_ids = jax.random.randint(ki, (B, S), 0, V, dtype=jnp.int32)
        token_type_ids = jnp.concatenate(
            [jnp.zeros((B, S // 2), jnp.int32), jnp.ones((B, S // 2), jnp.int32)],
            axis=1)
        attention_mask = jnp.ones((B, S), jnp.int32)
        inputs = {"input_ids": input_ids,
                  "attention_mask": attention_mask,
                  "token_type_ids": token_type_ids}

        outputs = mrc_ner_model_forward(inputs, params, i_chunk=i_chunk,
                                        use_tanh_gelu=use_tanh_gelu)
        outputs = jax.block_until_ready(outputs)

        hidden_ref = standin_encoder(params, input_ids, attention_mask,
                                     token_type_ids)
        ref = reference_head(hidden_ref, params)
        # bf16 MXU operands / bf16 elementwise + tanh-approx GELU -> loosened
        # tolerance vs the all-f32 exact-GELU reference.
        for name in ("start_logits", "end_logits", "span_logits"):
            assert outputs[name].shape == ref[name].shape, name
            err = float(jnp.max(jnp.abs(outputs[name] - ref[name])))
            assert jnp.allclose(outputs[name], ref[name],
                                atol=3e-2, rtol=3e-2), (name, err)

    # Small case: exercises the in-kernel intermediate-dim chunk loop
    # (I=256 split into two 128-wide chunks) with the default tanh GELU.
    run_case(B=2, S=8, H=32, I=256, V=100, i_chunk=128)
    # Same small case on the exact-GELU path (PyTorch parity flag).
    run_case(B=2, S=8, H=32, I=256, V=100, i_chunk=128, use_tanh_gelu=False)
    # Tiled case: exercises the (B, S/Tj, S/Ti) span grid (Ti=64, Tj=128)
    # and the in-kernel 8-row sub-loop.
    run_case(B=1, S=256, H=32, I=128, V=100)

    print("KERNEL_OK")
</pallas_src>

<mosaic_0001>
module attributes {stable_mosaic.version = 11 : i64} {
  func.func @_proj_kernel(%arg0: i32, %arg1: i32, %arg2: memref<1x8x32xf32, #tpu.memory_space<vmem>>, %arg3: memref<32x2xbf16, #tpu.memory_space<vmem>>, %arg4: memref<1x2xf32, #tpu.memory_space<vmem>>, %arg5: memref<32x256xbf16, #tpu.memory_space<vmem>>, %arg6: memref<32x256xbf16, #tpu.memory_space<vmem>>, %arg7: memref<1x256xf32, #tpu.memory_space<vmem>>, %arg8: memref<1x8x2xf32, #tpu.memory_space<vmem>>, %arg9: memref<1x8x256xbf16, #tpu.memory_space<vmem>>, %arg10: memref<1x8x256xbf16, #tpu.memory_space<vmem>>) attributes {dimension_semantics = [#tpu.dimension_semantics<parallel>, #tpu.dimension_semantics<parallel>], iteration_bounds = array<i64: 2, 1>, scalar_prefetch = 0 : i64, scratch_operands = 0 : i64, tpu.core_type = #tpu.core_type<tc>, window_params = [{transform_indices = @transform_0, window_bounds = array<i64: 1, 8, 32>}, {pipeline_mode = #tpu.pipeline_mode<synchronous>, transform_indices = @transform_1, window_bounds = array<i64: 32, 2>}, {pipeline_mode = #tpu.pipeline_mode<synchronous>, transform_indices = @transform_2, window_bounds = array<i64: 1, 2>}, {pipeline_mode = #tpu.pipeline_mode<synchronous>, transform_indices = @transform_3, window_bounds = array<i64: 32, 256>}, {pipeline_mode = #tpu.pipeline_mode<synchronous>, transform_indices = @transform_4, window_bounds = array<i64: 32, 256>}, {pipeline_mode = #tpu.pipeline_mode<synchronous>, transform_indices = @transform_5, window_bounds = array<i64: 1, 256>}, {transform_indices = @transform_6, window_bounds = array<i64: 1, 8, 2>}, {transform_indices = @transform_7, window_bounds = array<i64: 1, 8, 256>}, {transform_indices = @transform_8, window_bounds = array<i64: 1, 8, 256>}]} {
    %c0 = arith.constant 0 : index
    %c0_0 = arith.constant 0 : index
    %c0_1 = arith.constant 0 : index
    %0 = vector.load %arg2[%c0, %c0_0, %c0_1] : memref<1x8x32xf32, #tpu.memory_space<vmem>>, vector<1x8x32xf32>
    %1 = vector.shape_cast %0 : vector<1x8x32xf32> to vector<8x32xf32>
    %2 = arith.truncf %1 : vector<8x32xf32> to vector<8x32xbf16>
    %c0_2 = arith.constant 0 : index
    %c0_3 = arith.constant 0 : index
    %3 = vector.load %arg3[%c0_2, %c0_3] : memref<32x2xbf16, #tpu.memory_space<vmem>>, vector<32x2xbf16>
    %cst = arith.constant dense<0.000000e+00> : vector<8x2xf32>
    %4 = tpu.matmul %2, %3, %cst {dimension_numbers = #tpu.dot_dimension_numbers<[1], [0], [0], [1], [0, 0, 1, 1], [], []>} : vector<8x32xbf16>, vector<32x2xbf16>, vector<8x2xf32> -> vector<8x2xf32>
    %c0_4 = arith.constant 0 : index
    %c0_5 = arith.constant 0 : index
    %5 = vector.load %arg4[%c0_4, %c0_5] : memref<1x2xf32, #tpu.memory_space<vmem>>, vector<1x2xf32>
    %6 = vector.broadcast %5 : vector<1x2xf32> to vector<8x2xf32>
    %7 = arith.addf %4, %6 : vector<8x2xf32>
    %c0_6 = arith.constant 0 : index
    %c0_7 = arith.constant 0 : index
    %c0_8 = arith.constant 0 : index
    %8 = vector.load %arg8[%c0_6, %c0_7, %c0_8] : memref<1x8x2xf32, #tpu.memory_space<vmem>>, vector<1x8x2xf32>
    %9 = vector.shape_cast %8 : vector<1x8x2xf32> to vector<8x2xf32>
    %10 = vector.shape_cast %7 : vector<8x2xf32> to vector<1x8x2xf32>
    tpu.vector_store %arg8[%c0_6, %c0_7, %c0_8], %10 {strides = array<i32>} : memref<1x8x2xf32, #tpu.memory_space<vmem>>, vector<1x8x2xf32>,
    %c0_9 = arith.constant 0 : index
    %c0_10 = arith.constant 0 : index
    %11 = vector.load %arg5[%c0_9, %c0_10] : memref<32x256xbf16, #tpu.memory_space<vmem>>, vector<32x256xbf16>
    %cst_11 = arith.constant dense<0.000000e+00> : vector<8x256xf32>
    %12 = tpu.matmul %2, %11, %cst_11 {dimension_numbers = #tpu.dot_dimension_numbers<[1], [0], [0], [1], [0, 0, 1, 1], [], []>} : vector<8x32xbf16>, vector<32x256xbf16>, vector<8x256xf32> -> vector<8x256xf32>
    %c0_12 = arith.constant 0 : index
    %c0_13 = arith.constant 0 : index
    %13 = vector.load %arg7[%c0_12, %c0_13] : memref<1x256xf32, #tpu.memory_space<vmem>>, vector<1x256xf32>
    %14 = vector.broadcast %13 : vector<1x256xf32> to vector<8x256xf32>
    %15 = arith.addf %12, %14 : vector<8x256xf32>
    %16 = arith.truncf %15 : vector<8x256xf32> to vector<8x256xbf16>
    %c0_14 = arith.constant 0 : index
    %c0_15 = arith.constant 0 : index
    %c0_16 = arith.constant 0 : index
    %17 = vector.load %arg9[%c0_14, %c0_15, %c0_16] : memref<1x8x256xbf16, #tpu.memory_space<vmem>>, vector<1x8x256xbf16>
    %18 = vector.shape_cast %17 : vector<1x8x256xbf16> to vector<8x256xbf16>
    %19 = vector.shape_cast %16 : vector<8x256xbf16> to vector<1x8x256xbf16>
    tpu.vector_store %arg9[%c0_14, %c0_15, %c0_16], %19 {strides = array<i32>} : memref<1x8x256xbf16, #tpu.memory_space<vmem>>, vector<1x8x256xbf16>,
    %c0_17 = arith.constant 0 : index
    %c0_18 = arith.constant 0 : index
    %20 = vector.load %arg6[%c0_17, %c0_18] : memref<32x256xbf16, #tpu.memory_space<vmem>>, vector<32x256xbf16>
    %cst_19 = arith.constant dense<0.000000e+00> : vector<8x256xf32>
    %21 = tpu.matmul %2, %20, %cst_19 {dimension_numbers = #tpu.dot_dimension_numbers<[1], [0], [0], [1], [0, 0, 1, 1], [], []>} : vector<8x32xbf16>, vector<32x256xbf16>, vector<8x256xf32> -> vector<8x256xf32>
    %22 = arith.truncf %21 : vector<8x256xf32> to vector<8x256xbf16>
    %c0_20 = arith.constant 0 : index
    %c0_21 = arith.constant 0 : index
    %c0_22 = arith.constant 0 : index
    %23 = vector.load %arg10[%c0_20, %c0_21, %c0_22] : memref<1x8x256xbf16, #tpu.memory_space<vmem>>, vector<1x8x256xbf16>
    %24 = vector.shape_cast %23 : vector<1x8x256xbf16> to vector<8x256xbf16>
    %25 = vector.shape_cast %22 : vector<8x256xbf16> to vector<1x8x256xbf16>
    tpu.vector_store %arg10[%c0_20, %c0_21, %c0_22], %25 {strides = array<i32>} : memref<1x8x256xbf16, #tpu.memory_space<vmem>>, vector<1x8x256xbf16>,
    return
  }
  func.func @transform_0(%arg0: i32, %arg1: i32) -> (i32, i32, i32) {
    %c0_i32 = arith.constant 0 : i32
    %c0_i32_0 = arith.constant 0 : i32
    return %arg0, %arg1, %c0_i32 : i32, i32, i32
  }
  func.func @transform_1(%arg0: i32, %arg1: i32) -> (i32, i32) {
    %c0_i32 = arith.constant 0 : i32
    %c0_i32_0 = arith.constant 0 : i32
    %c0_i32_1 = arith.constant 0 : i32
    return %c0_i32, %c0_i32_0 : i32, i32
  }
  func.func @transform_2(%arg0: i32, %arg1: i32) -> (i32, i32) {
    %c0_i32 = arith.constant 0 : i32
    %c0_i32_0 = arith.constant 0 : i32
    %c0_i32_1 = arith.constant 0 : i32
    return %c0_i32, %c0_i32_0 : i32, i32
  }
  func.func @transform_3(%arg0: i32, %arg1: i32) -> (i32, i32) {
    %c0_i32 = arith.constant 0 : i32
    %c0_i32_0 = arith.constant 0 : i32
    %c0_i32_1 = arith.constant 0 : i32
    return %c0_i32, %c0_i32_0 : i32, i32
  }
  func.func @transform_4(%arg0: i32, %arg1: i32) -> (i32, i32) {
    %c0_i32 = arith.constant 0 : i32
    %c0_i32_0 = arith.constant 0 : i32
    %c0_i32_1 = arith.constant 0 : i32
    return %c0_i32, %c0_i32_0 : i32, i32
  }
  func.func @transform_5(%arg0: i32, %arg1: i32) -> (i32, i32) {
    %c0_i32 = arith.constant 0 : i32
    %c0_i32_0 = arith.constant 0 : i32
    %c0_i32_1 = arith.constant 0 : i32
    return %c0_i32, %c0_i32_0 : i32, i32
  }
  func.func @transform_6(%arg0: i32, %arg1: i32) -> (i32, i32, i32) {
    %c0_i32 = arith.constant 0 : i32
    %c0_i32_0 = arith.constant 0 : i32
    return %arg0, %arg1, %c0_i32 : i32, i32, i32
  }
  func.func @transform_7(%arg0: i32, %arg1: i32) -> (i32, i32, i32) {
    %c0_i32 = arith.constant 0 : i32
    %c0_i32_0 = arith.constant 0 : i32
    return %arg0, %arg1, %c0_i32 : i32, i32, i32
  }
  func.func @transform_8(%arg0: i32, %arg1: i32) -> (i32, i32, i32) {
    %c0_i32 = arith.constant 0 : i32
    %c0_i32_0 = arith.constant 0 : i32
    return %arg0, %arg1, %c0_i32 : i32, i32, i32
  }
}

</mosaic_0001>

<llo_original>
// kernel: tpu_custom_call.1
$region0: #{tpu_custom_call.1}
  #allocation0 [shape = 'u32[]', space=smem, size = 0x4, offset = 0x4, fixed_abs, tag = 'smem constant byte address 0x4 - core index']
  #allocation1 [shape = 'u32[144,128]{1,0:T(1,128)}', space=vmem, size = 0x12000, scoped, tag = 'internal scratch']
  %s0 = inlined_call_operand.hbm [shape: f32[2,8,32], index: 0, kind: input, shape index: {}]
  %s1 = inlined_call_operand.vmem [shape: bf16[32,2], index: 1, kind: input, shape index: {}]
  %s2 = inlined_call_operand.hbm [shape: f32[1,2], index: 2, kind: input, shape index: {}]
  %s3 = inlined_call_operand.hbm [shape: bf16[32,256], index: 3, kind: input, shape index: {}]
  %s4 = inlined_call_operand.vmem [shape: bf16[32,256], index: 4, kind: input, shape index: {}]
  %s5 = inlined_call_operand.vmem [shape: f32[1,256], index: 5, kind: input, shape index: {}]
  %s6 = inlined_call_operand.vmem [shape: f32[2,8,2], index: 6, kind: output, shape index: {0}]
  %s7 = inlined_call_operand.hbm [shape: bf16[2,8,256], index: 7, kind: output, shape index: {1}]
  %s8 = inlined_call_operand.hbm [shape: bf16[2,8,256], index: 8, kind: output, shape index: {2}]
  %9 = xla_tuple %s6, %s7, %s8
  %s10 = sld [smem:[#allocation0]]
  $region85: #{tpu_custom_call.1} parent=0
    _
  %s12 = ssub.s32 1, %s10
  %s13 = scalar_select 0, %s12, %s10
  $region1: #{tpu_custom_call.1} parent=0
    #allocation2 [shape = 'u8[8192]{0}', space=vmem, size = 0x2000, scoped, tag = 'input window, operand 0']
    #allocation3 [shape = 's32[2]{0}', space=sflag, size = 0x8, scoped, tag = 'scoped memory for tpu_custom_call.1']
    #allocation4 [shape = 's32[2]{0}', space=sflag, size = 0x8, scoped, tag = 'scoped memory for tpu_custom_call.1']
    #allocation5 [shape = 'u8[512]{0}', space=vmem, size = 0x400, scoped, tag = 'input window, operand 2, single buffered']
    #allocation6 [shape = 's32[1]{0}', space=sflag, size = 0x4, scoped, tag = 'scoped memory for tpu_custom_call.1']
    #allocation7 [shape = 'u8[16384]{0}', space=vmem, size = 0x4000, scoped, tag = 'input window, operand 3, single buffered']
    #allocation8 [shape = 'u8[8192]{0}', space=vmem, size = 0x2000, scoped, tag = 'output window, operand 1']
    #allocation9 [shape = 'u8[8192]{0}', space=vmem, size = 0x2000, scoped, tag = 'output window, operand 2']
    #allocation10 [shape = 's32[2]{0}', space=sflag, size = 0x8, scoped, tag = 'scoped memory for tpu_custom_call.1']
    %14 = vsyncpa [#allocation3], 0
    %s15 = scalar_lea.sflag [#allocation3], 1
    %16 = vsyncpa %s15, 0
    %17 = vsyncpa [#allocation6], 0
    %18 = vsyncpa [#allocation4], 0
    %s19 = scalar_lea.sflag [#allocation4], 1
    %20 = vsyncpa %s19, 0
    %21 = vsyncpa [#allocation10], 0
    %s22 = scalar_lea.sflag [#allocation10], 1
    %23 = vsyncpa %s22, 0
    loop: start=0, step=1, limit=4
    $region2: #{tpu_custom_call.1} parent=1 // loop_pre_header
      _
    $region3: #{tpu_custom_call.1} parent=1 // loop_header
      %s25 = sphi 0, %s29
      %p26 = scmp.ge.s32.totalorder %s25, 4
      %s32 = sphi 0, %s44
      %s33 = sphi 0, %s40
      %s34 = sphi 0, %s32
      %s35 = sphi 0, %s33
      %s36 = sphi 0, %s34
      %s37 = sphi 0, %s35
      %s49 = sphi 0, %s51
      %s52 = sphi 0, %s49
      %s53 = sphi 0, %s52
      %s69 = sphi 0, %s53
      %s73 = sphi 0, %s73
      %s75 = sphi 0, %s73
      %s76 = sphi 0, %s75
      %s90 = sphi 0, %s76
      %s94 = sphi 0, %s94
      %s96 = sphi 0, %s94
      %s97 = sphi 0, %s96
      %s111 = sphi 0, %s97
      %s115 = sphi 0, %s115
      %s117 = sphi 0, %s115
      %s118 = sphi 0, %s117
      %s132 = sphi 0, %s118
      %s136 = sphi 0, %s136
      %s138 = sphi 0, %s136
      %s139 = sphi 0, %s138
      %s153 = sphi 0, %s139
      %s157 = sphi 0, %s157
      %s159 = sphi 0, %s157
      %s160 = sphi 0, %s159
      %s174 = sphi 0, %s160
      %s182 = sphi 0, %s184
      %s185 = sphi 0, %s182
      %s186 = sphi 0, %s185
      %s202 = sphi 0, %s186
      %s210 = sphi 0, %s212
      %s213 = sphi 0, %s210
      %s214 = sphi 0, %s213
      %s230 = sphi 0, %s214
      %s238 = sphi 0, %s240
      %s241 = sphi 0, %s238
      %s242 = sphi 0, %s241
      %s258 = sphi 0, %s242
    $region4: #{tpu_custom_call.1} parent=1 // loop_header_branch
      %28 = sbr.rel (%p26) target = $region8
    $region5: #{tpu_custom_call.1} parent=1 // loop_body
      %s30 = ssub.s32 %s25, 1
      %s31 = ssub.s32 %s25, 2
      %s38 = sadd.s32 1, %s33
      %p39 = scmp.ge.s32.totalorder %s38, 1
      %s40 = scalar_select %p39, 0, %s38
      %s41 = sadd.s32 1, %s32
      %s42 = scalar_select %p39, %s41, %s32
      %p43 = scmp.ge.s32.totalorder %s42, 2
      %s44 = scalar_select %p43, 0, %s42
      %s45 = ssub.s32 %s32, %s44
      %s46 = ssub.s32 %s33, %s40
      %s47 = sor.u32 %s45, %s46
      %p48 = scmp.eq.s32.totalorder %s47, 0
      %s50 = sadd.s32 %s49, 1
      %s51 = scalar_select %p48, %s49, %s50
      %p54 = pneg %p48
      %p55 = scmp.eq.s32.totalorder %s25, 1
      %p56 = por %p54, %p55
      %p57 = scmp.ne.s32.totalorder %s49, %s52
      %p58 = scmp.eq.s32.totalorder %s25, 0
      %p59 = por %p57, %p58
      %p60 = scmp.ne.s32.totalorder %s49, %s52
      %p61 = scmp.eq.s32.totalorder %s30, 1
      %p62 = por %p60, %p61
      %p63 = scmp.ne.s32.totalorder %s52, %s53
      %p64 = scmp.eq.s32.totalorder %s30, 0
      %p65 = por %p63, %p64
      %p66 = scmp.ne.s32.totalorder %s52, %s53
      %p67 = scmp.eq.s32.totalorder %s31, 1
      %p68 = por %p66, %p67
      %p70 = scmp.ne.s32.totalorder %s53, %s69
      %p71 = scmp.eq.s32.totalorder %s31, 0
      %p72 = por %p70, %p71
      %s74 = sadd.s32 %s73, 1
      %p77 = scmp.eq.s32.totalorder %s25, 1
      %p78 = scmp.ne.s32.totalorder %s73, %s75
      %p79 = scmp.eq.s32.totalorder %s25, 0
      %p80 = por %p78, %p79
      %p81 = scmp.ne.s32.totalorder %s73, %s75
      %p82 = scmp.eq.s32.totalorder %s30, 1
      %p83 = por %p81, %p82
      %p84 = scmp.ne.s32.totalorder %s75, %s76
      %p85 = scmp.eq.s32.totalorder %s30, 0
      %p86 = por %p84, %p85
      %p87 = scmp.ne.s32.totalorder %s75, %s76
      %p88 = scmp.eq.s32.totalorder %s31, 1
      %p89 = por %p87, %p88
      %p91 = scmp.ne.s32.totalorder %s76, %s90
      %p92 = scmp.eq.s32.totalorder %s31, 0
      %p93 = por %p91, %p92
      %s95 = sadd.s32 %s94, 1
      %p98 = scmp.eq.s32.totalorder %s25, 1
      %p99 = scmp.ne.s32.totalorder %s94, %s96
      %p100 = scmp.eq.s32.totalorder %s25, 0
      %p101 = por %p99, %p100
      %p102 = scmp.ne.s32.totalorder %s94, %s96
      %p103 = scmp.eq.s32.totalorder %s30, 1
      %p104 = por %p102, %p103
      %p105 = scmp.ne.s32.totalorder %s96, %s97
      %p106 = scmp.eq.s32.totalorder %s30, 0
      %p107 = por %p105, %p106
      %p108 = scmp.ne.s32.totalorder %s96, %s97
      %p109 = scmp.eq.s32.totalorder %s31, 1
      %p110 = por %p108, %p109
      %p112 = scmp.ne.s32.totalorder %s97, %s111
      %p113 = scmp.eq.s32.totalorder %s31, 0
      %p114 = por %p112, %p113
      %s116 = sadd.s32 %s115, 1
      %p119 = scmp.eq.s32.totalorder %s25, 1
      %p120 = scmp.ne.s32.totalorder %s115, %s117
      %p121 = scmp.eq.s32.totalorder %s25, 0
      %p122 = por %p120, %p121
      %p123 = scmp.ne.s32.totalorder %s115, %s117
      %p124 = scmp.eq.s32.totalorder %s30, 1
      %p125 = por %p123, %p124
      %p126 = scmp.ne.s32.totalorder %s117, %s118
      %p127 = scmp.eq.s32.totalorder %s30, 0
      %p128 = por %p126, %p127
      %p129 = scmp.ne.s32.totalorder %s117, %s118
      %p130 = scmp.eq.s32.totalorder %s31, 1
      %p131 = por %p129, %p130
      %p133 = scmp.ne.s32.totalorder %s118, %s132
      %p134 = scmp.eq.s32.totalorder %s31, 0
      %p135 = por %p133, %p134
      %s137 = sadd.s32 %s136, 1
      %p140 = scmp.eq.s32.totalorder %s25, 1
      %p141 = scmp.ne.s32.totalorder %s136, %s138
      %p142 = scmp.eq.s32.totalorder %s25, 0
      %p143 = por %p141, %p142
      %p144 = scmp.ne.s32.totalorder %s136, %s138
      %p145 = scmp.eq.s32.totalorder %s30, 1
      %p146 = por %p144, %p145
      %p147 = scmp.ne.s32.totalorder %s138, %s139
      %p148 = scmp.eq.s32.totalorder %s30, 0
      %p149 = por %p147, %p148
      %p150 = scmp.ne.s32.totalorder %s138, %s139
      %p151 = scmp.eq.s32.totalorder %s31, 1
      %p152 = por %p150, %p151
      %p154 = scmp.ne.s32.totalorder %s139, %s153
      %p155 = scmp.eq.s32.totalorder %s31, 0
      %p156 = por %p154, %p155
      %s158 = sadd.s32 %s157, 1
      %p161 = scmp.eq.s32.totalorder %s25, 1
      %p162 = scmp.ne.s32.totalorder %s157, %s159
      %p163 = scmp.eq.s32.totalorder %s25, 0
      %p164 = por %p162, %p163
      %p165 = scmp.ne.s32.totalorder %s157, %s159
      %p166 = scmp.eq.s32.totalorder %s30, 1
      %p167 = por %p165, %p166
      %p168 = scmp.ne.s32.totalorder %s159, %s160
      %p169 = scmp.eq.s32.totalorder %s30, 0
      %p170 = por %p168, %p169
      %p171 = scmp.ne.s32.totalorder %s159, %s160
      %p172 = scmp.eq.s32.totalorder %s31, 1
      %p173 = por %p171, %p172
      %p175 = scmp.ne.s32.totalorder %s160, %s174
      %p176 = scmp.eq.s32.totalorder %s31, 0
      %p177 = por %p175, %p176
      %s178 = ssub.s32 %s32, %s44
      %s179 = ssub.s32 %s33, %s40
      %s180 = sor.u32 %s178, %s179
      %p181 = scmp.eq.s32.totalorder %s180, 0
      %s183 = sadd.s32 %s182, 1
      %s184 = scalar_select %p181, %s182, %s183
      %p187 = pneg %p181
      %p188 = scmp.eq.s32.totalorder %s25, 1
      %p189 = por %p187, %p188
      %p190 = scmp.ne.s32.totalorder %s182, %s185
      %p191 = scmp.eq.s32.totalorder %s25, 0
      %p192 = por %p190, %p191
      %p193 = scmp.ne.s32.totalorder %s182, %s185
      %p194 = scmp.eq.s32.totalorder %s30, 1
      %p195 = por %p193, %p194
      %p196 = scmp.ne.s32.totalorder %s185, %s186
      %p197 = scmp.eq.s32.totalorder %s30, 0
      %p198 = por %p196, %p197
      %p199 = scmp.ne.s32.totalorder %s185, %s186
      %p200 = scmp.eq.s32.totalorder %s31, 1
      %p201 = por %p199, %p200
      %p203 = scmp.ne.s32.totalorder %s186, %s202
      %p204 = scmp.eq.s32.totalorder %s31, 0
      %p205 = por %p203, %p204
      %s206 = ssub.s32 %s32, %s44
      %s207 = ssub.s32 %s33, %s40
      %s208 = sor.u32 %s206, %s207
      %p209 = scmp.eq.s32.totalorder %s208, 0
      %s211 = sadd.s32 %s210, 1
      %s212 = scalar_select %p209, %s210, %s211
      %p215 = pneg %p209
      %p216 = scmp.eq.s32.totalorder %s25, 1
      %p217 = por %p215, %p216
      %p218 = scmp.ne.s32.totalorder %s210, %s213
      %p219 = scmp.eq.s32.totalorder %s25, 0
      %p220 = por %p218, %p219
      %p221 = scmp.ne.s32.totalorder %s210, %s213
      %p222 = scmp.eq.s32.totalorder %s30, 1
      %p223 = por %p221, %p222
      %p224 = scmp.ne.s32.totalorder %s213, %s214
      %p225 = scmp.eq.s32.totalorder %s30, 0
      %p226 = por %p224, %p225
      %p227 = scmp.ne.s32.totalorder %s213, %s214
      %p228 = scmp.eq.s32.totalorder %s31, 1
      %p229 = por %p227, %p228
      %p231 = scmp.ne.s32.totalorder %s214, %s230
      %p232 = scmp.eq.s32.totalorder %s31, 0
      %p233 = por %p231, %p232
      %s234 = ssub.s32 %s32, %s44
      %s235 = ssub.s32 %s33, %s40
      %s236 = sor.u32 %s234, %s235
      %p237 = scmp.eq.s32.totalorder %s236, 0
      %s239 = sadd.s32 %s238, 1
      %s240 = scalar_select %p237, %s238, %s239
      %p243 = pneg %p237
      %p244 = scmp.eq.s32.totalorder %s25, 1
      %p245 = por %p243, %p244
      %p246 = scmp.ne.s32.totalorder %s238, %s241
      %p247 = scmp.eq.s32.totalorder %s25, 0
      %p248 = por %p246, %p247
      %p249 = scmp.ne.s32.totalorder %s238, %s241
      %p250 = scmp.eq.s32.totalorder %s30, 1
      %p251 = por %p249, %p250
      %p252 = scmp.ne.s32.totalorder %s241, %s242
      %p253 = scmp.eq.s32.totalorder %s30, 0
      %p254 = por %p252, %p253
      %p255 = scmp.ne.s32.totalorder %s241, %s242
      %p256 = scmp.eq.s32.totalorder %s31, 1
      %p257 = por %p255, %p256
      %p259 = scmp.ne.s32.totalorder %s242, %s258
      %p260 = scmp.eq.s32.totalorder %s31, 0
      %p261 = por %p259, %p260
      %p262 = scmp.le.s32.totalorder 1, %s25
      %p263 = scmp.lt.s32.totalorder %s25, 3
      %p264 = pnand %p262, %p263
      %p265 = pneg %p264
      // Predicated region
      $region9: #{tpu_custom_call.1} parent=5 // pred_check
        _
      $region10: #{tpu_custom_call.1} parent=5 // pred_check_branch
        %267 = sbr.rel (%p264) target = $region12
      $region11: #{tpu_custom_call.1} parent=5 // pred_region
        %s268 = ssub.s32 %s25, 1
        // Predicated region
        $region13: #{tpu_custom_call.1} parent=11 // pred_check
          %p269 = pneg %p86
        $region14: #{tpu_custom_call.1} parent=11 // pred_check_branch
          %271 = sbr.rel (%p269) target = $region16
        $region15: #{tpu_custom_call.1} parent=11 // pred_region
          _
        $region16: #{tpu_custom_call.1} parent=11 // pred_fallthru
          _
        // Predicated region
        $region17: #{tpu_custom_call.1} parent=11 // pred_check
          %p272 = pneg %p107
        $region18: #{tpu_custom_call.1} parent=11 // pred_check_branch
          %274 = sbr.rel (%p272) target = $region20
        $region19: #{tpu_custom_call.1} parent=11 // pred_region
          %s276 = ssub.s32 16, 16
          %277 = vsyncadd [#allocation6], %s276
          %s279 = sshll.u32 [#allocation5], 4
          %s280 = int_to_ptr.vmem [resolvable:$true] %s279
          %282 = dma.hbm_to_vmem [thread:$0]  %s2, 16, %s280, [#allocation6]
        $region20: #{tpu_custom_call.1} parent=11 // pred_fallthru
          _
        // Predicated region
        $region21: #{tpu_custom_call.1} parent=11 // pred_check
          %p283 = pneg %p128
        $region22: #{tpu_custom_call.1} parent=11 // pred_check_branch
          %285 = sbr.rel (%p283) target = $region24
        $region23: #{tpu_custom_call.1} parent=11 // pred_region
          %s287 = ssub.s32 512, 512
          %288 = vsyncadd [#allocation6], %s287
          %s289 = sshll.u32 [#allocation7], 4
          %s290 = int_to_ptr.vmem [resolvable:$true] %s289
          %295 = dma.hbm_to_vmem [thread:$0]  %s3, 512, %s290, [#allocation6], 128, 128, 8
        $region24: #{tpu_custom_call.1} parent=11 // pred_fallthru
          _
        // Predicated region
        $region25: #{tpu_custom_call.1} parent=11 // pred_check
          %p296 = pneg %p149
        $region26: #{tpu_custom_call.1} parent=11 // pred_check_branch
          %298 = sbr.rel (%p296) target = $region28
        $region27: #{tpu_custom_call.1} parent=11 // pred_region
          _
        $region28: #{tpu_custom_call.1} parent=11 // pred_fallthru
          _
        // Predicated region
        $region29: #{tpu_custom_call.1} parent=11 // pred_check
          %p299 = pneg %p170
        $region30: #{tpu_custom_call.1} parent=11 // pred_check_branch
          %301 = sbr.rel (%p299) target = $region32
        $region31: #{tpu_custom_call.1} parent=11 // pred_region
          _
        $region32: #{tpu_custom_call.1} parent=11 // pred_fallthru
          _
      $region12: #{tpu_custom_call.1} parent=5 // pred_fallthru
        _
      %p302 = scmp.lt.s32.totalorder %s25, 2
      // Predicated region
      $region33: #{tpu_custom_call.1} parent=5 // pred_check
        %p303 = pneg %p302
      $region34: #{tpu_custom_call.1} parent=5 // pred_check_branch
        %305 = sbr.rel (%p303) target = $region36
      $region35: #{tpu_custom_call.1} parent=5 // pred_region
        // Predicated region
        $region37: #{tpu_custom_call.1} parent=35 // pred_check
          %p306 = pneg %p59
        $region38: #{tpu_custom_call.1} parent=35 // pred_check_branch
          %308 = sbr.rel (%p306) target = $region40
        $region39: #{tpu_custom_call.1} parent=35 // pred_region
          %s309 = sand.u32 %s49, 1
          %s310 = scalar_lea.sflag [#allocation3], %s309
          %s311 = sand.u32 %s49, 1
          %s312 = smul.addr %s311, 8
          %s313 = scalar_lea.vmem [#allocation2], %s312
          %s315 = ssub.s32 128, 128
          %316 = vsyncadd %s310, %s315
          %s317 = sadd.s32 %s33, %s32
          %s318 = smul.addr %s317, 128
          %s319 = scalar_lea.hbm %s0, %s318
          %s321 = sshll.u32 %s313, 4
          %s322 = int_to_ptr.vmem [resolvable:$true] %s321
          %324 = dma.hbm_to_vmem [thread:$0]  %s319, 128, %s322, %s310
        $region40: #{tpu_custom_call.1} parent=35 // pred_fallthru
          _
      $region36: #{tpu_custom_call.1} parent=5 // pred_fallthru
        _
      %p325 = scmp.le.s32.totalorder 1, %s25
      %p326 = scmp.lt.s32.totalorder %s25, 3
      %p327 = pnand %p325, %p326
      %p328 = pneg %p327
      // Predicated region
      $region41: #{tpu_custom_call.1} parent=5 // pred_check
        _
      $region42: #{tpu_custom_call.1} parent=5 // pred_check_branch
        %330 = sbr.rel (%p327) target = $region44
      $region43: #{tpu_custom_call.1} parent=5 // pred_region
        %s331 = ssub.s32 %s25, 1
        %s332 = sand.u32 %s52, 1
        %s333 = scalar_lea.sflag [#allocation3], %s332
        %s334 = sand.u32 %s52, 1
        %s335 = smul.addr %s334, 8
        %s336 = scalar_lea.vmem [#allocation2], %s335
        // Predicated region
        $region45: #{tpu_custom_call.1} parent=43 // pred_check
          %p337 = pneg %p65
        $region46: #{tpu_custom_call.1} parent=43 // pred_check_branch
          %339 = sbr.rel (%p337) target = $region48
        $region47: #{tpu_custom_call.1} parent=43 // pred_region
          %340 = dma.done %s333, 128
        $region48: #{tpu_custom_call.1} parent=43 // pred_fallthru
          _
        // Predicated region
        $region49: #{tpu_custom_call.1} parent=43 // pred_check
          %p341 = pneg %p107
        $region50: #{tpu_custom_call.1} parent=43 // pred_check_branch
          %343 = sbr.rel (%p341) target = $region52
        $region51: #{tpu_custom_call.1} parent=43 // pred_region
          %344 = dma.done [#allocation6], 16
        $region52: #{tpu_custom_call.1} parent=43 // pred_fallthru
          _
        // Predicated region
        $region53: #{tpu_custom_call.1} parent=43 // pred_check
          %p345 = pneg %p128
        $region54: #{tpu_custom_call.1} parent=43 // pred_check_branch
          %347 = sbr.rel (%p345) target = $region56
        $region55: #{tpu_custom_call.1} parent=43 // pred_region
          %348 = dma.done [#allocation6], 512
        $region56: #{tpu_custom_call.1} parent=43 // pred_fallthru
          _
        %s349 = sand.u32 %s52, 1
        %s350 = scalar_lea.sflag [#allocation3], %s349
        %s351 = sand.u32 %s52, 1
        %s352 = smul.addr %s351, 8
        %s353 = scalar_lea.vmem [#allocation2], %s352
        %p354 = pneg %p65
        %p355 = pneg %p62
        %p356 = pneg %p86
        %p357 = pneg %p83
        %p358 = pneg %p107
        %p359 = pneg %p104
        %p360 = pneg %p128
        %p361 = pneg %p125
        %p362 = pneg %p149
        %p363 = pneg %p146
        %p364 = pneg %p170
        %p365 = pneg %p167
        %p366 = pneg %p198
        %p367 = pneg %p195
        %p368 = scmp.lt.s32.totalorder %s34, 1
        %s369 = scalar_select %p368, %s34, 1
        %p370 = scmp.lt.s32.totalorder %s35, 0
        %s371 = scalar_select %p370, %s35, 0
        %s372 = sadd.s32 %s371, %s369
        %s373 = smul.addr %s372, 8
        %s374 = scalar_lea.vmem %s6, %s373
        %p375 = pneg %p226
        %p376 = pneg %p223
        %s377 = sand.u32 %s213, 1
        %s378 = scalar_lea.sflag [#allocation4], %s377
        %s379 = sand.u32 %s213, 1
        %s380 = smul.addr %s379, 8
        %s381 = scalar_lea.vmem [#allocation8], %s380
        %p382 = pneg %p254
        %p383 = pneg %p251
        %s384 = sand.u32 %s241, 1
        %s385 = scalar_lea.sflag [#allocation10], %s384
        %s386 = sand.u32 %s241, 1
        %s387 = smul.addr %s386, 8
        %s388 = scalar_lea.vmem [#allocation9], %s387
        %p389 = scmp.lt.s32.totalorder %s34, 1
        %s390 = scalar_select %p389, %s34, 1
        %p391 = scmp.lt.s32.totalorder %s35, 0
        %s392 = scalar_select %p391, %s35, 0
        %s393 = sadd.s32 %s392, %s390
        %s394 = smul.addr %s393, 8
        %s395 = scalar_lea.vmem %s6, %s394
        %v397 = vld [vmem:[%s336] sm:$0xff]
        %v398 = vpack.c.bf16 %v397, %v397
        %v399 = vld [vmem:[%s1] sm:$0xf]
        %v400 = vld [vmem:[%s1 + $0x4] sm:$0xf]
        %v401 = vld [vmem:[%s1 + $0x8] sm:$0xf]
        %v402 = vld [vmem:[%s1 + $0xc] sm:$0xf]
        %v403 = vld [vmem:[#allocation5] sm:$0x1]
        %v405 = vlaneseq
        %v406 = vshrl.u32 %v405, 7
        %v407 = vsub.s32 0, %v406
        %v408 = vrot.slane %v403, %v407
        %v414 = vunpack.c.l.b16 %v399
        %v415 = vunpack.c.l.b16 %v400
        %v416 = vunpack.c.l.b16 %v401
        %v417 = vunpack.c.l.b16 %v402
        %v418 = vpack.c.b16 %v415, %v414
        %v419 = vpack.c.b16 %v417, %v416
        %vm422 = vcmask 261120
        %v424 = vsel %vm422, %v398, 0
        %426 = vmatprep.subr.bf16.mxu0 0
        %427 = vmatpush1.bf16.msra.mxu0 %v418
        %428 = vmatprep.subr.bf16.mxu0 0
        %429 = vmatpush1.bf16.msra.mxu0 %v419
        %430 = vmatprep.subr.bf16.mxu0 0
        %431 = vmatpush1.bf16.msra.mxu0 0
        %432 = vmatprep.subr.bf16.mxu0 0
        %433 = vmatpush1.bf16.msra.mxu0 0
        %434 = vmatprep.subr.bf16.mxu0 0
        %435 = vmatpush1.bf16.msra.mxu0 0
        %436 = vmatprep.subr.bf16.mxu0 0
        %437 = vmatpush1.bf16.msra.mxu0 0
        %438 = vmatprep.subr.bf16.mxu0 0
        %439 = vmatpush1.bf16.msra.mxu0 0
        %440 = vmatprep.subr.bf16.mxu0 0
        %441 = vmatpush1.bf16.msra.mxu0 0
        %442 = vmatprep.subr.bf16.mxu0 0
        %443 = vmatpush1.bf16.msra.mxu0 0
        %444 = vmatprep.subr.bf16.mxu0 0
        %445 = vmatpush1.bf16.msra.mxu0 0
        %446 = vmatprep.subr.bf16.mxu0 0
        %447 = vmatpush1.bf16.msra.mxu0 0
        %448 = vmatprep.subr.bf16.mxu0 0
        %449 = vmatpush1.bf16.msra.mxu0 0
        %450 = vmatprep.subr.bf16.mxu0 0
        %451 = vmatpush1.bf16.msra.mxu0 0
        %452 = vmatprep.subr.bf16.mxu0 0
        %453 = vmatpush1.bf16.msra.mxu0 0
        %454 = vmatprep.subr.bf16.mxu0 0
        %455 = vmatpush1.bf16.msra.mxu0 0
        %456 = vmatprep.subr.bf16.mxu0 0
        %457 = vmatpush1.bf16.msra.mxu0 0
        %458 = vmatprep.mubr.bf16.mxu0 0
        %459 = vmatmul.mubr.bf16.gmra.mrb[0].mxu0 %v424
        %v460 = vpop.f32.mrb[0].mxu0
        %v461 = vadd.f32 %v408, %v460
        %v462 = vpop.f32.mrb[0].mxu0
        %v463 = vpop.f32.mrb[0].mxu0
        %v464 = vpop.f32.mrb[0].mxu0
        %465 = vdwg.mxu0
        %vm466 = vcmask 15360
        %467 = vst.msk [vmem:[%s395] sm:$0xff] %vm466, %v461
        %v468 = vld [vmem:[#allocation7] sm:$0xff]
        %v469 = vld [vmem:[#allocation7 + $0x8] sm:$0xff]
        %v470 = vld [vmem:[#allocation7 + $0x10] sm:$0xff]
        %v471 = vld [vmem:[#allocation7 + $0x18] sm:$0xff]
        %v472 = vld [vmem:[%s5] sm:$0x3]
        %v474 = vlaneseq
        %v475 = vshrl.u32 %v474, 7
        %v476 = vsub.s32 0, %v475
        %v477 = vrot.slane %v472, %v476
        %v478 = vlaneseq
        %v479 = vshrl.u32 %v478, 7
        %v480 = vsub.s32 1, %v479
        %v481 = vrot.slane %v472, %v480
        %v488 = vunpack.c.l.b16 %v468
        %v489 = vunpack.c.h.b16 %v468
        %v490 = vunpack.c.l.b16 %v469
        %v491 = vunpack.c.h.b16 %v469
        %v492 = vunpack.c.l.b16 %v470
        %v493 = vunpack.c.h.b16 %v470
        %v494 = vunpack.c.l.b16 %v471
        %v495 = vunpack.c.h.b16 %v471
        %v496 = vpack.c.b16 %v490, %v488
        %v497 = vpack.c.b16 %v491, %v489
        %v498 = vpack.c.b16 %v494, %v492
        %v499 = vpack.c.b16 %v495, %v493
        %504 = vmatprep.subr.bf16.mxu0 %v497
        %505 = vmatpush1.bf16.msra.mxu0 %v496
        %506 = vmatprep.subr.bf16.mxu0 %v499
        %507 = vmatpush1.bf16.msra.mxu0 %v498
        %508 = vmatprep.subr.bf16.mxu0 0
        %509 = vmatpush1.bf16.msra.mxu0 0
        %510 = vmatprep.subr.bf16.mxu0 0
        %511 = vmatpush1.bf16.msra.mxu0 0
        %512 = vmatprep.subr.bf16.mxu0 0
        %513 = vmatpush1.bf16.msra.mxu0 0
        %514 = vmatprep.subr.bf16.mxu0 0
        %515 = vmatpush1.bf16.msra.mxu0 0
        %516 = vmatprep.subr.bf16.mxu0 0
        %517 = vmatpush1.bf16.msra.mxu0 0
        %518 = vmatprep.subr.bf16.mxu0 0
        %519 = vmatpush1.bf16.msra.mxu0 0
        %520 = vmatprep.subr.bf16.mxu0 0
        %521 = vmatpush1.bf16.msra.mxu0 0
        %522 = vmatprep.subr.bf16.mxu0 0
        %523 = vmatpush1.bf16.msra.mxu0 0
        %524 = vmatprep.subr.bf16.mxu0 0
        %525 = vmatpush1.bf16.msra.mxu0 0
        %526 = vmatprep.subr.bf16.mxu0 0
        %527 = vmatpush1.bf16.msra.mxu0 0
        %528 = vmatprep.subr.bf16.mxu0 0
        %529 = vmatpush1.bf16.msra.mxu0 0
        %530 = vmatprep.subr.bf16.mxu0 0
        %531 = vmatpush1.bf16.msra.mxu0 0
        %532 = vmatprep.subr.bf16.mxu0 0
        %533 = vmatpush1.bf16.msra.mxu0 0
        %534 = vmatprep.subr.bf16.mxu0 0
        %535 = vmatpush1.bf16.msra.mxu0 0
        %536 = vmatprep.mubr.bf16.mxu0 0
        %537 = vmatmul.mubr.bf16.gmra.mrb[0].mxu0 %v424
        %v538 = vpop.f32.mrb[0].mxu0
        %v539 = vadd.f32 %v477, %v538
        %v540 = vpop.f32.mrb[0].mxu0
        %v541 = vadd.f32 %v481, %v540
        %v542 = vpop.f32.mrb[0].mxu0
        %v543 = vpop.f32.mrb[0].mxu0
        %544 = vdwg.mxu0
        %v545 = vpack.c.bf16 %v539, %v539
        %v546 = vpack.c.bf16 %v541, %v541
        %v549 = vunpack.c.l.b16 %v545
        %v550 = vunpack.c.l.b16 %v546
        %v551 = vpack.c.b16 %v550, %v549
        %553 = vst [vmem:[%s381] sm:$0xff] %v551
        %v554 = vld [vmem:[%s4] sm:$0xff]
        %v555 = vld [vmem:[%s4 + $0x8] sm:$0xff]
        %v556 = vld [vmem:[%s4 + $0x10] sm:$0xff]
        %v557 = vld [vmem:[%s4 + $0x18] sm:$0xff]
        %v562 = vunpack.c.l.b16 %v554
        %v563 = vunpack.c.h.b16 %v554
        %v564 = vunpack.c.l.b16 %v555
        %v565 = vunpack.c.h.b16 %v555
        %v566 = vunpack.c.l.b16 %v556
        %v567 = vunpack.c.h.b16 %v556
        %v568 = vunpack.c.l.b16 %v557
        %v569 = vunpack.c.h.b16 %v557
        %v570 = vpack.c.b16 %v564, %v562
        %v571 = vpack.c.b16 %v565, %v563
        %v572 = vpack.c.b16 %v568, %v566
        %v573 = vpack.c.b16 %v569, %v567
        %578 = vmatprep.subr.bf16.mxu0 %v571
        %579 = vmatpush1.bf16.msra.mxu0 %v570
        %580 = vmatprep.subr.bf16.mxu0 %v573
        %581 = vmatpush1.bf16.msra.mxu0 %v572
        %582 = vmatprep.subr.bf16.mxu0 0
        %583 = vmatpush1.bf16.msra.mxu0 0
        %584 = vmatprep.subr.bf16.mxu0 0
        %585 = vmatpush1.bf16.msra.mxu0 0
        %586 = vmatprep.subr.bf16.mxu0 0
        %587 = vmatpush1.bf16.msra.mxu0 0
        %588 = vmatprep.subr.bf16.mxu0 0
        %589 = vmatpush1.bf16.msra.mxu0 0
        %590 = vmatprep.subr.bf16.mxu0 0
        %591 = vmatpush1.bf16.msra.mxu0 0
        %592 = vmatprep.subr.bf16.mxu0 0
        %593 = vmatpush1.bf16.msra.mxu0 0
        %594 = vmatprep.subr.bf16.mxu0 0
        %595 = vmatpush1.bf16.msra.mxu0 0
        %596 = vmatprep.subr.bf16.mxu0 0
        %597 = vmatpush1.bf16.msra.mxu0 0
        %598 = vmatprep.subr.bf16.mxu0 0
        %599 = vmatpush1.bf16.msra.mxu0 0
        %600 = vmatprep.subr.bf16.mxu0 0
        %601 = vmatpush1.bf16.msra.mxu0 0
        %602 = vmatprep.subr.bf16.mxu0 0
        %603 = vmatpush1.bf16.msra.mxu0 0
        %604 = vmatprep.subr.bf16.mxu0 0
        %605 = vmatpush1.bf16.msra.mxu0 0
        %606 = vmatprep.subr.bf16.mxu0 0
        %607 = vmatpush1.bf16.msra.mxu0 0
        %608 = vmatprep.subr.bf16.mxu0 0
        %609 = vmatpush1.bf16.msra.mxu0 0
        %610 = vmatprep.mubr.bf16.mxu0 0
        %611 = vmatmul.mubr.bf16.gmra.mrb[0].mxu0 %v424
        %v612 = vpop.f32.mrb[0].mxu0
        %v613 = vadd.f32 0.0, %v612
        %v614 = vpop.f32.mrb[0].mxu0
        %v615 = vadd.f32 0.0, %v614
        %v616 = vpop.f32.mrb[0].mxu0
        %v617 = vpop.f32.mrb[0].mxu0
        %618 = vdwg.mxu0
        %v619 = vpack.c.bf16 %v613, %v613
        %v620 = vpack.c.bf16 %v615, %v615
        %v623 = vunpack.c.l.b16 %v619
        %v624 = vunpack.c.l.b16 %v620
        %v625 = vpack.c.b16 %v624, %v623
        %627 = vst [vmem:[%s388] sm:$0xff] %v625
        %p628 = scmp.lt.s32.totalorder %s34, 1
        %s629 = scalar_select %p628, %s34, 1
        %p630 = scmp.lt.s32.totalorder %s35, 0
        %s631 = scalar_select %p630, %s35, 0
        %s632 = sadd.s32 %s631, %s629
        %s633 = smul.addr %s632, 8
        %s634 = scalar_lea.vmem %s6, %s633
        %s635 = sand.u32 %s213, 1
        %s636 = scalar_lea.sflag [#allocation4], %s635
        %s637 = sand.u32 %s213, 1
        %s638 = smul.addr %s637, 8
        %s639 = scalar_lea.vmem [#allocation8], %s638
        %s640 = sand.u32 %s241, 1
        %s641 = scalar_lea.sflag [#allocation10], %s640
        %s642 = sand.u32 %s241, 1
        %s643 = smul.addr %s642, 8
        %s644 = scalar_lea.vmem [#allocation9], %s643
        // Predicated region
        $region57: #{tpu_custom_call.1} parent=43 // pred_check
          %p645 = pneg %p195
        $region58: #{tpu_custom_call.1} parent=43 // pred_check_branch
          %647 = sbr.rel (%p645) target = $region60
        $region59: #{tpu_custom_call.1} parent=43 // pred_region
          _
        $region60: #{tpu_custom_call.1} parent=43 // pred_fallthru
          _
        // Predicated region
        $region61: #{tpu_custom_call.1} parent=43 // pred_check
          %p648 = pneg %p223
        $region62: #{tpu_custom_call.1} parent=43 // pred_check_branch
          %650 = sbr.rel (%p648) target = $region64
        $region63: #{tpu_custom_call.1} parent=43 // pred_region
          %s652 = ssub.s32 128, 128
          %653 = vsyncadd %s636, %s652
          %s654 = smul.addr %s35, 2
          %s655 = smul.addr %s34, 2
          %s656 = sadd.s32 %s654, %s655
          %s657 = smul.addr %s656, 64
          %s658 = scalar_lea.hbm %s7, %s657
          %s660 = sshll.u32 %s639, 4
          %s661 = int_to_ptr.vmem [resolvable:$true] %s660
          %663 = dma.vmem_to_hbm [thread:$0]  %s661, 128, %s658, %s636
        $region64: #{tpu_custom_call.1} parent=43 // pred_fallthru
          _
        // Predicated region
        $region65: #{tpu_custom_call.1} parent=43 // pred_check
          %p664 = pneg %p251
        $region66: #{tpu_custom_call.1} parent=43 // pred_check_branch
          %666 = sbr.rel (%p664) target = $region68
        $region67: #{tpu_custom_call.1} parent=43 // pred_region
          %s668 = ssub.s32 128, 128
          %669 = vsyncadd %s641, %s668
          %s670 = smul.addr %s35, 2
          %s671 = smul.addr %s34, 2
          %s672 = sadd.s32 %s670, %s671
          %s673 = smul.addr %s672, 64
          %s674 = scalar_lea.hbm %s8, %s673
          %s676 = sshll.u32 %s644, 4
          %s677 = int_to_ptr.vmem [resolvable:$true] %s676
          %679 = dma.vmem_to_hbm [thread:$0]  %s677, 128, %s674, %s641
        $region68: #{tpu_custom_call.1} parent=43 // pred_fallthru
          _
      $region44: #{tpu_custom_call.1} parent=5 // pred_fallthru
        _
      %p680 = scmp.le.s32.totalorder 2, %s25
      // Predicated region
      $region69: #{tpu_custom_call.1} parent=5 // pred_check
        %p681 = pneg %p680
      $region70: #{tpu_custom_call.1} parent=5 // pred_check_branch
        %683 = sbr.rel (%p681) target = $region72
      $region71: #{tpu_custom_call.1} parent=5 // pred_region
        %s684 = ssub.s32 %s25, 2
        // Predicated region
        $region73: #{tpu_custom_call.1} parent=71 // pred_check
          %p685 = pneg %p201
        $region74: #{tpu_custom_call.1} parent=71 // pred_check_branch
          %687 = sbr.rel (%p685) target = $region76
        $region75: #{tpu_custom_call.1} parent=71 // pred_region
          %p688 = scmp.lt.s32.totalorder %s36, 1
          %s689 = scalar_select %p688, %s36, 1
          %p690 = scmp.lt.s32.totalorder %s37, 0
          %s691 = scalar_select %p690, %s37, 0
          %s692 = sadd.s32 %s691, %s689
          %s693 = smul.addr %s692, 8
          %s694 = scalar_lea.vmem %s6, %s693
        $region76: #{tpu_custom_call.1} parent=71 // pred_fallthru
          _
        // Predicated region
        $region77: #{tpu_custom_call.1} parent=71 // pred_check
          %p695 = pneg %p229
        $region78: #{tpu_custom_call.1} parent=71 // pred_check_branch
          %697 = sbr.rel (%p695) target = $region80
        $region79: #{tpu_custom_call.1} parent=71 // pred_region
          %s698 = sand.u32 %s214, 1
          %s699 = scalar_lea.sflag [#allocation4], %s698
          %s700 = sand.u32 %s214, 1
          %s701 = smul.addr %s700, 8
          %s702 = scalar_lea.vmem [#allocation8], %s701
          %703 = dma.done %s699, 128
        $region80: #{tpu_custom_call.1} parent=71 // pred_fallthru
          _
        // Predicated region
        $region81: #{tpu_custom_call.1} parent=71 // pred_check
          %p704 = pneg %p257
        $region82: #{tpu_custom_call.1} parent=71 // pred_check_branch
          %706 = sbr.rel (%p704) target = $region84
        $region83: #{tpu_custom_call.1} parent=71 // pred_region
          %s707 = sand.u32 %s242, 1
          %s708 = scalar_lea.sflag [#allocation10], %s707
          %s709 = sand.u32 %s242, 1
          %s710 = smul.addr %s709, 8
          %s711 = scalar_lea.vmem [#allocation9], %s710
          %712 = dma.done %s708, 128
        $region84: #{tpu_custom_call.1} parent=71 // pred_fallthru
          _
      $region72: #{tpu_custom_call.1} parent=5 // pred_fallthru
        _
    $region6: #{tpu_custom_call.1} parent=1 // loop_footer
      %s29 = sadd.s32 1, %s25
    $region7: #{tpu_custom_call.1} parent=1 // loop_footer_branch
      %24 = sbr.rel target = $region3
    $region8: #{tpu_custom_call.1} parent=1 // loop_exit
      _
    %713 = vsyncpa [#allocation3], 1
    %s714 = scalar_lea.sflag [#allocation3], 1
    %715 = vsyncpa %s714, 1
    %716 = vsyncpa [#allocation6], 1
    %717 = vsyncpa [#allocation4], 1
    %s718 = scalar_lea.sflag [#allocation4], 1
    %719 = vsyncpa %s718, 1
    %720 = vsyncpa [#allocation10], 1
    %s721 = scalar_lea.sflag [#allocation10], 1
    %722 = vsyncpa %s721, 1

</llo_original>
